<compile_context>
chip_gen: v7x
topology: tpu7x:2x2x1
jax: 0.10.0
libtpu: 0.0.40
codegen_flags: <defaults>
</compile_context>

<pallas_src>
import functools

import jax
import jax.numpy as jnp
from jax.experimental import pallas as pl
from jax.experimental.pallas import tpu as pltpu


def _cdiv(a, b):
    return -(-a // b)


def _round_down(v, m):
    return (v // m) * m


def _round_up(v, m):
    return _cdiv(v, m) * m


def _sublane_multiple(dtype) -> int:
    # f32/int32: 8 sublanes, bf16/f16: 16, int8/fp8: 32 (sublane packing).
    itemsize = jnp.dtype(dtype).itemsize
    return max(8, 32 // max(1, itemsize))


@functools.lru_cache(maxsize=None)
def _chip_caps():
    """(target_step_bytes, vmem_blocks_budget, vmem_limit_cap) per TPU gen."""
    try:
        kind = jax.devices()[0].device_kind.lower()
    except Exception:
        kind = ""
    if "v7" in kind:
        # v7x: 64 MiB VMEM per TensorCore -> ~4 MiB tiles, keep headroom.
        return (4 << 20, 40 << 20, 56 << 20)
    if "v2" in kind or "v3" in kind:
        # Old generations: ~16 MiB VMEM.
        return (1 << 20, 8 << 20, 14 << 20)
    # v4 / v5e / v5p / v6e: 128 MiB physical VMEM -> ~8 MiB tiles, ~100 MiB cap.
    return (8 << 20, 80 << 20, 100 << 20)


def _copy_kernel(x_ref, o_ref):
    # Per-repeat path: pure tile copy; output block (i, j*ncol + c) <- input (i, c).
    o_ref[...] = x_ref[...]


def _make_collapsed_kernel(n, D):
    # Collapsed path: one input row tile -> n lane-aligned column slices of the
    # wide output block (static unroll, n <= 64).
    def kernel(x_ref, o_ref):
        x = x_ref[...]
        for k in range(n):
            o_ref[:, k * D:(k + 1) * D] = x
    return kernel


def repeat_last_dim(x, n, *, _force_per_repeat=False, _max_tn=None):
    """Pallas equivalent of Repeat(n): torch.cat([x]*n, dim=-1)."""
    if n == 1:
        return x

    orig_shape = x.shape
    D = orig_shape[-1]
    R = 1
    for s in orig_shape[:-1]:
        R *= s
    iz = jnp.dtype(x.dtype).itemsize
    sub = _sublane_multiple(x.dtype)

    # Lane/sublane-unfriendly shapes -> XLA broadcast copy (masked partial-lane
    # stores would dominate a Pallas version there).
    if D == 0 or R == 0 or D % 128 != 0 or R % sub != 0:
        x3d = x.reshape(R, 1, D)
        out = jnp.broadcast_to(x3d, (R, n, D))
        return out.reshape(*orig_shape[:-1], n * D)

    target, budget, cap = _chip_caps()
    x2d = x.reshape(R, D)
    total_bytes = R * D * (n + 1) * iz  # 1 read + n writes

    # ---------- Path A: collapsed repeat axis (one wide store per row tile) ----------
    use_collapsed = (not _force_per_repeat) and n <= 64
    if use_collapsed:
        per_row = (n + 1) * D * iz                              # in + out bytes per row
        tm_vmem = _round_down(budget // (2 * per_row), sub)     # double-buffered
        use_collapsed = tm_vmem >= sub

    if use_collapsed:
        tm_tgt = max(sub, _round_down(target // (n * D * iz), sub))
        tm = max(sub, min(R, tm_vmem, tm_tgt))
        # Megacore (v7x has 2 TCs): keep at least two row blocks when possible.
        if _cdiv(R, tm) < 2 and R >= 2 * sub:
            tm = _round_up(_cdiv(R, 2), sub)
        need = 2 * tm * (n + 1) * D * iz
        vmem_limit = int(min(cap, max(2 * need, 16 << 20)))

        out2d = pl.pallas_call(
            _make_collapsed_kernel(n, D),
            out_shape=jax.ShapeDtypeStruct((R, n * D), x.dtype),
            grid_spec=pltpu.PrefetchScalarGridSpec(
                num_scalar_prefetch=0,
                grid=(_cdiv(R, tm),),                 # cdiv: partial edge row block OK
                in_specs=[pl.BlockSpec((tm, D), lambda i: (i, 0))],
                out_specs=pl.BlockSpec((tm, n * D), lambda i: (i, 0)),
            ),
            compiler_params=pltpu.CompilerParams(
                dimension_semantics=("parallel",),
                vmem_limit_bytes=vmem_limit,
            ),
            cost_estimate=pl.CostEstimate(
                flops=0, transcendentals=0, bytes_accessed=total_bytes),
        )(x2d)
        return out2d.reshape(*orig_shape[:-1], n * D)

    # ---------- Path B: per-repeat grid, optionally lane-tiled (huge D / huge n) ----------
    # tn: largest divisor of D that is a multiple of 128 and keeps the
    # double-buffered in+out blocks within the VMEM budget even at tm == sub.
    tn_cap = budget // (4 * sub * iz)
    tn_cap = min(tn_cap, max(128, target // (sub * iz)))
    if _max_tn is not None:
        tn_cap = min(tn_cap, _max_tn)
    m = D // 128
    tn = 128
    for d in range(max(1, min(m, tn_cap // 128)), 0, -1):
        if m % d == 0:
            tn = 128 * d
            break
    ncol = D // tn

    tm_vmem = max(sub, _round_down(budget // (4 * tn * iz), sub))
    tm_tgt = max(sub, _round_down(target // (tn * iz), sub))
    tm = max(sub, min(R, tm_vmem, tm_tgt))
    nrow = _cdiv(R, tm)
    if nrow * ncol < 2 and R >= 2 * sub:
        tm = _round_up(_cdiv(R, 2), sub)
        nrow = _cdiv(R, tm)
    # Every (row, col, repeat) output block is written exactly once, so the
    # repeat axis may also be marked parallel; only do so when the row/col grid
    # alone cannot feed both v7x TensorCores (keeps input-block reuse otherwise).
    rep_sem = "arbitrary" if nrow * ncol >= 2 else "parallel"

    need = 4 * tm * tn * iz
    vmem_limit = int(min(cap, max(2 * need, 16 << 20)))

    out2d = pl.pallas_call(
        _copy_kernel,
        out_shape=jax.ShapeDtypeStruct((R, n * D), x.dtype),
        grid_spec=pltpu.PrefetchScalarGridSpec(
            num_scalar_prefetch=0,
            # repeat axis innermost: input block (i, c) is unchanged across the
            # n copies -> no input re-DMA.
            grid=(nrow, ncol, n),
            in_specs=[pl.BlockSpec((tm, tn), lambda i, c, j: (i, c))],
            out_specs=pl.BlockSpec((tm, tn), lambda i, c, j: (i, j * ncol + c)),
        ),
        compiler_params=pltpu.CompilerParams(
            dimension_semantics=("parallel", "parallel", rep_sem),
            vmem_limit_bytes=vmem_limit,
        ),
        cost_estimate=pl.CostEstimate(
            flops=0, transcendentals=0, bytes_accessed=total_bytes),
    )(x2d)
    return out2d.reshape(*orig_shape[:-1], n * D)


class Repeat:
    """JAX/Pallas equivalent of the PyTorch Repeat(n) module."""

    def __init__(self, n):
        self.n = n

    def __call__(self, x):
        return repeat_last_dim(x, self.n)


if __name__ == "__main__":
    key = jax.random.PRNGKey(0)
    keys = jax.random.split(key, 6)

    def check(x, n, **kw):
        out = jax.block_until_ready(repeat_last_dim(x, n, **kw))
        ref = jnp.concatenate([x for _ in range(n)], axis=-1)
        assert out.shape == ref.shape, (out.shape, ref.shape)
        assert out.dtype == x.dtype, (out.dtype, x.dtype)
        assert jnp.array_equal(out, ref), "mismatch vs concat reference"
        return out

    n = 3
    # 1) Module demo shape (D=16 -> lane-unaligned -> XLA bypass path).
    check(jax.random.normal(keys[0], (2, 4, 16, 16), dtype=jnp.float32), n)
    # 2) Lane-aligned f32 -> collapsed Pallas path (wide store, >=2 row blocks).
    check(jax.random.normal(keys[1], (2, 4, 8, 128), dtype=jnp.float32), n)
    # 3) bf16 (16-row sublane packing) on the collapsed path.
    check(jax.random.normal(keys[2], (2, 4, 8, 128), dtype=jnp.bfloat16), n)
    # 4) Awkward row count -> cdiv grid with a partial edge row block.
    check(jax.random.normal(keys[3], (1, 40, 128), dtype=jnp.float32), n)
    # 5) Per-repeat + lane-tiled path (forced small to exercise it).
    check(jax.random.normal(keys[4], (16, 256), dtype=jnp.float32), n,
          _force_per_repeat=True, _max_tn=128)
    # 6) Large repeat count (n > 64) takes the per-repeat path naturally.
    check(jax.random.normal(keys[5], (16, 128), dtype=jnp.float32), 65)

    # Module-style usage, as in the original PyTorch spec.
    rep = Repeat(n)
    _ = jax.block_until_ready(
        rep(jax.random.normal(keys[1], (2, 4, 8, 128), dtype=jnp.float32)))

    print("KERNEL_OK")
</pallas_src>

<mosaic_0001>
module attributes {stable_mosaic.version = 11 : i64} {
  func.func @kernel(%arg0: i32, %arg1: memref<32x128xf32, #tpu.memory_space<vmem>>, %arg2: memref<32x384xf32, #tpu.memory_space<vmem>>) attributes {dimension_semantics = [#tpu.dimension_semantics<parallel>], iteration_bounds = array<i64: 2>, scalar_prefetch = 0 : i64, scratch_operands = 0 : i64, tpu.core_type = #tpu.core_type<tc>, window_params = [{transform_indices = @transform_0, window_bounds = array<i64: 32, 128>}, {transform_indices = @transform_1, window_bounds = array<i64: 32, 384>}]} {
    %c0 = arith.constant 0 : index
    %c0_0 = arith.constant 0 : index
    %0 = vector.load %arg1[%c0, %c0_0] : memref<32x128xf32, #tpu.memory_space<vmem>>, vector<32x128xf32>
    %c0_1 = arith.constant 0 : index
    %c0_2 = arith.constant 0 : index
    %1 = vector.load %arg2[%c0_1, %c0_2] : memref<32x384xf32, #tpu.memory_space<vmem>>, vector<32x128xf32>
    tpu.vector_store %arg2[%c0_1, %c0_2], %0 {strides = array<i32>} : memref<32x384xf32, #tpu.memory_space<vmem>>, vector<32x128xf32>,
    %c0_3 = arith.constant 0 : index
    %c128 = arith.constant 128 : index
    %2 = vector.load %arg2[%c0_3, %c128] : memref<32x384xf32, #tpu.memory_space<vmem>>, vector<32x128xf32>
    tpu.vector_store %arg2[%c0_3, %c128], %0 {strides = array<i32>} : memref<32x384xf32, #tpu.memory_space<vmem>>, vector<32x128xf32>,
    %c0_4 = arith.constant 0 : index
    %c256 = arith.constant 256 : index
    %3 = vector.load %arg2[%c0_4, %c256] : memref<32x384xf32, #tpu.memory_space<vmem>>, vector<32x128xf32>
    tpu.vector_store %arg2[%c0_4, %c256], %0 {strides = array<i32>} : memref<32x384xf32, #tpu.memory_space<vmem>>, vector<32x128xf32>,
    return
  }
  func.func @transform_0(%arg0: i32) -> (i32, i32) {
    %c0_i32 = arith.constant 0 : i32
    %c0_i32_0 = arith.constant 0 : i32
    return %arg0, %c0_i32 : i32, i32
  }
  func.func @transform_1(%arg0: i32) -> (i32, i32) {
    %c0_i32 = arith.constant 0 : i32
    %c0_i32_0 = arith.constant 0 : i32
    return %arg0, %c0_i32 : i32, i32
  }
}

</mosaic_0001>

<llo_original>
// kernel: tpu_custom_call.1
$region0: #{tpu_custom_call.1}
  #allocation0 [shape = 'u32[]', space=smem, size = 0x4, offset = 0x4, fixed_abs, tag = 'smem constant byte address 0x4 - core index']
  #allocation1 [shape = 'u32[144,128]{1,0:T(1,128)}', space=vmem, size = 0x12000, scoped, tag = 'internal scratch']
  %s0 = inlined_call_operand.hbm [shape: f32[64,128], index: 0, kind: input, shape index: {}]
  %s1 = inlined_call_operand.hbm [shape: f32[64,384], index: 1, kind: output, shape index: {}]
  %s2 = sld [smem:[#allocation0]]
  $region41: #{tpu_custom_call.1} parent=0
    _
  %s4 = ssub.s32 1, %s2
  %s5 = scalar_select 0, %s4, %s2
  $region1: #{tpu_custom_call.1} parent=0
    #allocation2 [shape = 'u8[32768]{0}', space=vmem, size = 0x8000, scoped, tag = 'input window, operand 0']
    #allocation3 [shape = 's32[2]{0}', space=sflag, size = 0x8, scoped, tag = 'scoped memory for tpu_custom_call.1']
    #allocation4 [shape = 's32[2]{0}', space=sflag, size = 0x8, scoped, tag = 'scoped memory for tpu_custom_call.1']
    #allocation5 [shape = 'u8[98304]{0}', space=vmem, size = 0x18000, scoped, tag = 'output window, operand 0']
    %6 = vsyncpa [#allocation3], 0
    %s7 = scalar_lea.sflag [#allocation3], 1
    %8 = vsyncpa %s7, 0
    %9 = vsyncpa [#allocation4], 0
    %s10 = scalar_lea.sflag [#allocation4], 1
    %11 = vsyncpa %s10, 0
    loop: start=0, step=1, limit=4
    $region2: #{tpu_custom_call.1} parent=1 // loop_pre_header
      _
    $region3: #{tpu_custom_call.1} parent=1 // loop_header
      %s13 = sphi 0, %s17
      %p14 = scmp.ge.s32.totalorder %s13, 4
      %s23 = sphi 0, %s25
      %s26 = sphi 0, %s23
      %s27 = sphi 0, %s26
      %s43 = sphi 0, %s27
      %s49 = sphi 0, %s51
      %s52 = sphi 0, %s49
      %s53 = sphi 0, %s52
      %s69 = sphi 0, %s53
    $region4: #{tpu_custom_call.1} parent=1 // loop_header_branch
      %16 = sbr.rel (%p14) target = $region8
    $region5: #{tpu_custom_call.1} parent=1 // loop_body
      %s18 = ssub.s32 %s13, 1
      %s19 = ssub.s32 %s13, 2
      %s20 = sadd.s32 %s13, 1
      %s21 = ssub.s32 %s13, %s20
      %p22 = scmp.eq.s32.totalorder %s21, 0
      %s24 = sadd.s32 %s23, 1
      %s25 = scalar_select %p22, %s23, %s24
      %p28 = pneg %p22
      %p29 = scmp.eq.s32.totalorder %s13, 1
      %p30 = por %p28, %p29
      %p31 = scmp.ne.s32.totalorder %s23, %s26
      %p32 = scmp.eq.s32.totalorder %s13, 0
      %p33 = por %p31, %p32
      %p34 = scmp.ne.s32.totalorder %s23, %s26
      %p35 = scmp.eq.s32.totalorder %s18, 1
      %p36 = por %p34, %p35
      %p37 = scmp.ne.s32.totalorder %s26, %s27
      %p38 = scmp.eq.s32.totalorder %s18, 0
      %p39 = por %p37, %p38
      %p40 = scmp.ne.s32.totalorder %s26, %s27
      %p41 = scmp.eq.s32.totalorder %s19, 1
      %p42 = por %p40, %p41
      %p44 = scmp.ne.s32.totalorder %s27, %s43
      %p45 = scmp.eq.s32.totalorder %s19, 0
      %p46 = por %p44, %p45
      %s47 = ssub.s32 %s13, %s20
      %p48 = scmp.eq.s32.totalorder %s47, 0
      %s50 = sadd.s32 %s49, 1
      %s51 = scalar_select %p48, %s49, %s50
      %p54 = pneg %p48
      %p55 = scmp.eq.s32.totalorder %s13, 1
      %p56 = por %p54, %p55
      %p57 = scmp.ne.s32.totalorder %s49, %s52
      %p58 = scmp.eq.s32.totalorder %s13, 0
      %p59 = por %p57, %p58
      %p60 = scmp.ne.s32.totalorder %s49, %s52
      %p61 = scmp.eq.s32.totalorder %s18, 1
      %p62 = por %p60, %p61
      %p63 = scmp.ne.s32.totalorder %s52, %s53
      %p64 = scmp.eq.s32.totalorder %s18, 0
      %p65 = por %p63, %p64
      %p66 = scmp.ne.s32.totalorder %s52, %s53
      %p67 = scmp.eq.s32.totalorder %s19, 1
      %p68 = por %p66, %p67
      %p70 = scmp.ne.s32.totalorder %s53, %s69
      %p71 = scmp.eq.s32.totalorder %s19, 0
      %p72 = por %p70, %p71
      %p73 = scmp.le.s32.totalorder 1, %s13
      %p74 = scmp.lt.s32.totalorder %s13, 3
      %p75 = pnand %p73, %p74
      %p76 = pneg %p75
      // Predicated region
      $region9: #{tpu_custom_call.1} parent=5 // pred_check
        _
      $region10: #{tpu_custom_call.1} parent=5 // pred_check_branch
        %78 = sbr.rel (%p75) target = $region12
      $region11: #{tpu_custom_call.1} parent=5 // pred_region
        %s79 = ssub.s32 %s13, 1
      $region12: #{tpu_custom_call.1} parent=5 // pred_fallthru
        _
      %p80 = scmp.lt.s32.totalorder %s13, 2
      // Predicated region
      $region13: #{tpu_custom_call.1} parent=5 // pred_check
        %p81 = pneg %p80
      $region14: #{tpu_custom_call.1} parent=5 // pred_check_branch
        %83 = sbr.rel (%p81) target = $region16
      $region15: #{tpu_custom_call.1} parent=5 // pred_region
        // Predicated region
        $region17: #{tpu_custom_call.1} parent=15 // pred_check
          %p84 = pneg %p33
        $region18: #{tpu_custom_call.1} parent=15 // pred_check_branch
          %86 = sbr.rel (%p84) target = $region20
        $region19: #{tpu_custom_call.1} parent=15 // pred_region
          %s87 = sand.u32 %s23, 1
          %s88 = scalar_lea.sflag [#allocation3], %s87
          %s89 = sand.u32 %s23, 1
          %s90 = smul.addr %s89, 32
          %s91 = scalar_lea.vmem [#allocation2], %s90
          %s92 = smul.u32 4, %s13
          %s94 = ssub.s32 512, 512
          %95 = vsyncadd %s88, %s94
          %s96 = smul.addr %s92, 128
          %s97 = scalar_lea.hbm %s0, %s96
          %s98 = sshll.u32 %s91, 4
          %s99 = int_to_ptr.vmem [resolvable:$true] %s98
          %104 = dma.hbm_to_vmem [thread:$0]  %s97, 512, %s99, %s88, 128, 128, 8
        $region20: #{tpu_custom_call.1} parent=15 // pred_fallthru
          _
      $region16: #{tpu_custom_call.1} parent=5 // pred_fallthru
        _
      %p105 = scmp.le.s32.totalorder 1, %s13
      %p106 = scmp.lt.s32.totalorder %s13, 3
      %p107 = pnand %p105, %p106
      %p108 = pneg %p107
      // Predicated region
      $region21: #{tpu_custom_call.1} parent=5 // pred_check
        _
      $region22: #{tpu_custom_call.1} parent=5 // pred_check_branch
        %110 = sbr.rel (%p107) target = $region24
      $region23: #{tpu_custom_call.1} parent=5 // pred_region
        %s111 = ssub.s32 %s13, 1
        %s112 = sand.u32 %s26, 1
        %s113 = scalar_lea.sflag [#allocation3], %s112
        %s114 = sand.u32 %s26, 1
        %s115 = smul.addr %s114, 32
        %s116 = scalar_lea.vmem [#allocation2], %s115
        // Predicated region
        $region25: #{tpu_custom_call.1} parent=23 // pred_check
          %p117 = pneg %p39
        $region26: #{tpu_custom_call.1} parent=23 // pred_check_branch
          %119 = sbr.rel (%p117) target = $region28
        $region27: #{tpu_custom_call.1} parent=23 // pred_region
          %120 = dma.done %s113, 512
        $region28: #{tpu_custom_call.1} parent=23 // pred_fallthru
          _
        %s121 = sand.u32 %s26, 1
        %s122 = scalar_lea.sflag [#allocation3], %s121
        %s123 = sand.u32 %s26, 1
        %s124 = smul.addr %s123, 32
        %s125 = scalar_lea.vmem [#allocation2], %s124
        %p126 = pneg %p39
        %p127 = pneg %p36
        %p128 = pneg %p65
        %p129 = pneg %p62
        %s130 = sand.u32 %s52, 1
        %s131 = scalar_lea.sflag [#allocation4], %s130
        %s132 = sand.u32 %s52, 1
        %s133 = smul.addr %s132, 96
        %s134 = scalar_lea.vmem [#allocation5], %s133
        %s135 = smul.u32 4, %s18
        %s136 = smul.u32 4, %s18
        %v137 = vld [vmem:[%s116] sm:$0xff]
        %v138 = vld [vmem:[%s116 + $0x8] sm:$0xff]
        %v139 = vld [vmem:[%s116 + $0x10] sm:$0xff]
        %v140 = vld [vmem:[%s116 + $0x18] sm:$0xff]
        %141 = vst [vmem:[%s134] sm:$0xff] %v137
        %142 = vst [vmem:[%s134 + $0x18] sm:$0xff] %v138
        %143 = vst [vmem:[%s134 + $0x30] sm:$0xff] %v139
        %144 = vst [vmem:[%s134 + $0x48] sm:$0xff] %v140
        %145 = vst [vmem:[%s134 + $0x8] sm:$0xff] %v137
        %146 = vst [vmem:[%s134 + $0x20] sm:$0xff] %v138
        %147 = vst [vmem:[%s134 + $0x38] sm:$0xff] %v139
        %148 = vst [vmem:[%s134 + $0x50] sm:$0xff] %v140
        %149 = vst [vmem:[%s134 + $0x10] sm:$0xff] %v137
        %150 = vst [vmem:[%s134 + $0x28] sm:$0xff] %v138
        %151 = vst [vmem:[%s134 + $0x40] sm:$0xff] %v139
        %152 = vst [vmem:[%s134 + $0x58] sm:$0xff] %v140
        %s153 = sand.u32 %s52, 1
        %s154 = scalar_lea.sflag [#allocation4], %s153
        %s155 = sand.u32 %s52, 1
        %s156 = smul.addr %s155, 96
        %s157 = scalar_lea.vmem [#allocation5], %s156
        // Predicated region
        $region29: #{tpu_custom_call.1} parent=23 // pred_check
          %p158 = pneg %p62
        $region30: #{tpu_custom_call.1} parent=23 // pred_check_branch
          %160 = sbr.rel (%p158) target = $region32
        $region31: #{tpu_custom_call.1} parent=23 // pred_region
          %s161 = smul.u32 4, %s18
          %s163 = ssub.s32 1536, 1536
          %164 = vsyncadd %s154, %s163
          %s165 = smul.addr %s161, 3
          %s166 = smul.addr %s165, 128
          %s167 = scalar_lea.hbm %s1, %s166
          %s168 = sshll.u32 %s157, 4
          %s169 = int_to_ptr.vmem [resolvable:$true] %s168
          %174 = dma.vmem_to_hbm [thread:$0]  %s169, 1536, %s167, %s154, 384, 384, 24
        $region32: #{tpu_custom_call.1} parent=23 // pred_fallthru
          _
      $region24: #{tpu_custom_call.1} parent=5 // pred_fallthru
        _
      %p175 = scmp.le.s32.totalorder 2, %s13
      // Predicated region
      $region33: #{tpu_custom_call.1} parent=5 // pred_check
        %p176 = pneg %p175
      $region34: #{tpu_custom_call.1} parent=5 // pred_check_branch
        %178 = sbr.rel (%p176) target = $region36
      $region35: #{tpu_custom_call.1} parent=5 // pred_region
        %s179 = ssub.s32 %s13, 2
        // Predicated region
        $region37: #{tpu_custom_call.1} parent=35 // pred_check
          %p180 = pneg %p68
        $region38: #{tpu_custom_call.1} parent=35 // pred_check_branch
          %182 = sbr.rel (%p180) target = $region40
        $region39: #{tpu_custom_call.1} parent=35 // pred_region
          %s183 = sand.u32 %s53, 1
          %s184 = scalar_lea.sflag [#allocation4], %s183
          %s185 = sand.u32 %s53, 1
          %s186 = smul.addr %s185, 96
          %s187 = scalar_lea.vmem [#allocation5], %s186
          %188 = dma.done %s184, 1536
        $region40: #{tpu_custom_call.1} parent=35 // pred_fallthru
          _
      $region36: #{tpu_custom_call.1} parent=5 // pred_fallthru
        _
    $region6: #{tpu_custom_call.1} parent=1 // loop_footer
      %s17 = sadd.s32 1, %s13
    $region7: #{tpu_custom_call.1} parent=1 // loop_footer_branch
      %12 = sbr.rel target = $region3
    $region8: #{tpu_custom_call.1} parent=1 // loop_exit
      _
    %189 = vsyncpa [#allocation3], 1
    %s190 = scalar_lea.sflag [#allocation3], 1
    %191 = vsyncpa %s190, 1
    %192 = vsyncpa [#allocation4], 1
    %s193 = scalar_lea.sflag [#allocation4], 1
    %194 = vsyncpa %s193, 1

</llo_original>
